<compile_context>
chip_gen: v7x
topology: tpu7x:2x2x1
jax: 0.10.0
libtpu: 0.0.40
codegen_flags: <defaults>
</compile_context>

<pallas_src>
import jax
import jax.numpy as jnp
from jax.experimental import pallas as pl
from jax.experimental.pallas import tpu as pltpu

NEG_SLOPE = 0.1
# BatchNorm2d.__init__ calls super().__init__(channels) only, so eps stays at the
# PyTorch default 1e-5 (the momentum=0.001/eps=0.001 args are never forwarded).
BN_EPS = 1e-5
# 48 MiB: below v7x's 64 MiB/TC physical VMEM; v5e/v6e (128 MiB) could go higher.
VMEM_LIMIT = 48 * 1024 * 1024


# ---------------- BN batch-stat partials (per-image sums, parallel grid) ----------------

def _bn_partials_kernel(x_ref, sum_ref, sq_ref):
    x = x_ref[...].astype(jnp.float32)            # (H, W, C)
    c = x.shape[-1]
    x2d = x.reshape(-1, c)
    sum_ref[...] = jnp.sum(x2d, axis=0, keepdims=True)
    sq_ref[...] = jnp.sum(x2d * x2d, axis=0, keepdims=True)


def bn_partials(x):
    """Per-image (1, C) sum / sum-of-squares over an unpadded NHWC tensor."""
    n, h, w, c = x.shape
    return pl.pallas_call(
        _bn_partials_kernel,
        grid=(n,),
        in_specs=[pl.BlockSpec((None, h, w, c), lambda i: (i, 0, 0, 0))],
        out_specs=[
            pl.BlockSpec((None, 1, c), lambda i: (i, 0, 0)),
            pl.BlockSpec((None, 1, c), lambda i: (i, 0, 0)),
        ],
        out_shape=[
            jax.ShapeDtypeStruct((n, 1, c), jnp.float32),
            jax.ShapeDtypeStruct((n, 1, c), jnp.float32),
        ],
        compiler_params=pltpu.CompilerParams(
            dimension_semantics=("parallel",),
            vmem_limit_bytes=VMEM_LIMIT,
        ),
    )(x)


def finalize_bn(sum_p, sq_p, gamma, beta, count):
    """O(C) finalize: per-image partials -> per-channel (scale, shift).

    Training-mode BN with biased variance; the division uses the true element
    count (no padding ever enters the statistics).  E[x^2]-mean^2 in f32 is fine
    at these sizes; use a shifted/two-pass scheme for very large N*H*W.
    """
    inv = 1.0 / float(count)
    s = jnp.sum(sum_p, axis=(0, 1))
    q = jnp.sum(sq_p, axis=(0, 1))
    mean = s * inv
    var = q * inv - mean * mean
    scale = gamma * jax.lax.rsqrt(var + BN_EPS)
    shift = beta - mean * scale
    c = scale.shape[0]
    return (scale.reshape(1, c).astype(jnp.float32),
            shift.reshape(1, c).astype(jnp.float32))


# ---------------- in-kernel helpers ----------------

def _bn_lrelu(x, scale_ref, shift_ref):
    c = x.shape[-1]
    y = x * scale_ref[...].reshape(1, 1, c) + shift_ref[...].reshape(1, 1, c)
    return jnp.maximum(y, NEG_SLOPE * y)          # LeakyReLU(0.1), single VALU op


def _extract_patches(a_ref, ho, wo, stride):
    """im2col entirely inside VMEM: 9 bf16 tap loads (strided for stride>1)."""
    c = a_ref.shape[-1]
    taps = []
    for kh in range(3):
        for kw in range(3):
            if stride == 1:
                t = a_ref[pl.ds(kh, ho), pl.ds(kw, wo), :]
            else:
                t = a_ref[pl.ds(kh, ho, stride=stride),
                          pl.ds(kw, wo, stride=stride), :]
            taps.append(t.reshape(ho * wo, c))
    return jnp.concatenate(taps, axis=-1)         # (ho*wo, 9*c) bf16


# ------- conv1: fused BN1 + LeakyReLU + pad + 3x3 (stride s) + BN2 partial stats -------

def _make_conv1_kernel(ho, wo, stride):
    def kernel(x_ref, sc_ref, sh_ref, w_ref, o_ref, sum_ref, sq_ref, a_ref):
        h, w, _ = x_ref.shape
        cmid = o_ref.shape[-1]
        act = _bn_lrelu(x_ref[...].astype(jnp.float32), sc_ref, sh_ref)
        # conv zero-padding happens AFTER BN+LeakyReLU in the reference: zero the
        # bf16 scratch and write the activated interior (VMEM only, no HBM pad pass).
        a_ref[...] = jnp.zeros_like(a_ref)
        a_ref[pl.ds(1, h), pl.ds(1, w), :] = act.astype(a_ref.dtype)
        patches = _extract_patches(a_ref, ho, wo, stride)
        acc = jnp.dot(patches, w_ref[...], preferred_element_type=jnp.float32)
        # ONE full-block store of the unpadded conv1 output (no zero-fill + offset store).
        o_ref[...] = acc.reshape(ho, wo, cmid).astype(o_ref.dtype)
        # Fused BN2 partial statistics, computed on the bf16-rounded values so the
        # stats match exactly what conv2 reads back from HBM.
        hr = acc.astype(jnp.bfloat16).astype(jnp.float32)
        sum_ref[...] = jnp.sum(hr, axis=0, keepdims=True)
        sq_ref[...] = jnp.sum(hr * hr, axis=0, keepdims=True)

    return kernel


def conv1_bn_lrelu(x, scale1, shift1, w_mat, *, stride, ho, wo):
    n, h, w, cin = x.shape
    k, cmid = w_mat.shape
    cost = pl.CostEstimate(
        flops=2 * n * ho * wo * k * cmid,
        transcendentals=0,
        bytes_accessed=(x.size + w_mat.size + n * ho * wo * cmid) * 2,
    )
    return pl.pallas_call(
        _make_conv1_kernel(ho, wo, stride),
        grid=(n,),
        in_specs=[
            pl.BlockSpec((None, h, w, cin), lambda i: (i, 0, 0, 0)),
            pl.BlockSpec((1, cin), lambda i: (0, 0)),
            pl.BlockSpec((1, cin), lambda i: (0, 0)),
            pl.BlockSpec((k, cmid), lambda i: (0, 0)),
        ],
        out_specs=[
            pl.BlockSpec((None, ho, wo, cmid), lambda i: (i, 0, 0, 0)),
            pl.BlockSpec((None, 1, cmid), lambda i: (i, 0, 0)),
            pl.BlockSpec((None, 1, cmid), lambda i: (i, 0, 0)),
        ],
        out_shape=[
            jax.ShapeDtypeStruct((n, ho, wo, cmid), jnp.bfloat16),
            jax.ShapeDtypeStruct((n, 1, cmid), jnp.float32),
            jax.ShapeDtypeStruct((n, 1, cmid), jnp.float32),
        ],
        scratch_shapes=[pltpu.VMEM((h + 2, w + 2, cin), jnp.bfloat16)],
        compiler_params=pltpu.CompilerParams(
            dimension_semantics=("parallel",),
            vmem_limit_bytes=VMEM_LIMIT,
        ),
        cost_estimate=cost,
    )(x, scale1, shift1, w_mat)


# --- conv2: fused BN2 + LeakyReLU + pad + 3x3 + (1x1 identity via concat-K) + residual add ---

def _make_conv2_kernel(ho, wo, stride, has_wid, ident_preact):
    def kernel(h_ref, sc2_ref, sh2_ref, w_ref, x_ref, sc1_ref, sh1_ref, o_ref, a_ref):
        cout = o_ref.shape[-1]
        cin = x_ref.shape[-1]
        act = _bn_lrelu(h_ref[...].astype(jnp.float32), sc2_ref, sh2_ref)
        a_ref[...] = jnp.zeros_like(a_ref)
        a_ref[pl.ds(1, ho), pl.ds(1, wo), :] = act.astype(a_ref.dtype)
        patches = _extract_patches(a_ref, ho, wo, 1)

        # identity branch: sample x at the conv stride in-kernel (no HBM xs pass).
        if stride == 1:
            xs = x_ref[...]
        else:
            xs = x_ref[pl.ds(0, ho, stride=stride), pl.ds(0, wo, stride=stride), :]
        xs = xs.astype(jnp.float32)
        iv = _bn_lrelu(xs, sc1_ref, sh1_ref) if ident_preact else xs
        iv2d = iv.reshape(ho * wo, cin)

        if has_wid:
            # fused 1x1 identity conv: concat along K, w_ref = [w2 ; w_id]
            patches = jnp.concatenate([patches, iv2d.astype(patches.dtype)], axis=-1)
            acc = jnp.dot(patches, w_ref[...], preferred_element_type=jnp.float32)
        else:
            acc = jnp.dot(patches, w_ref[...], preferred_element_type=jnp.float32)
            acc = acc + iv2d                       # passthrough residual add
        o_ref[...] = acc.reshape(ho, wo, cout).astype(o_ref.dtype)

    return kernel


def conv2_bn_lrelu_residual(h_act, scale2, shift2, w_cat, x, scale1, shift1, *,
                            stride, has_wid, ident_preact, out_c):
    n, ho, wo, cmid = h_act.shape
    _, hh, ww, cin = x.shape
    k = w_cat.shape[0]
    cost = pl.CostEstimate(
        flops=2 * n * ho * wo * k * out_c,
        transcendentals=0,
        bytes_accessed=(h_act.size + x.size + w_cat.size) * 2 + n * ho * wo * out_c * 4,
    )
    return pl.pallas_call(
        _make_conv2_kernel(ho, wo, stride, has_wid, ident_preact),
        grid=(n,),
        in_specs=[
            pl.BlockSpec((None, ho, wo, cmid), lambda i: (i, 0, 0, 0)),
            pl.BlockSpec((1, cmid), lambda i: (0, 0)),
            pl.BlockSpec((1, cmid), lambda i: (0, 0)),
            pl.BlockSpec((k, out_c), lambda i: (0, 0)),
            pl.BlockSpec((None, hh, ww, cin), lambda i: (i, 0, 0, 0)),
            pl.BlockSpec((1, cin), lambda i: (0, 0)),
            pl.BlockSpec((1, cin), lambda i: (0, 0)),
        ],
        out_specs=pl.BlockSpec((None, ho, wo, out_c), lambda i: (i, 0, 0, 0)),
        # f32 output to stay close to the PyTorch reference; emitting bf16 here
        # would halve writeback bytes if downstream tolerates it.
        out_shape=jax.ShapeDtypeStruct((n, ho, wo, out_c), jnp.float32),
        scratch_shapes=[pltpu.VMEM((ho + 2, wo + 2, cmid), jnp.bfloat16)],
        compiler_params=pltpu.CompilerParams(
            dimension_semantics=("parallel",),
            vmem_limit_bytes=VMEM_LIMIT,
        ),
        cost_estimate=cost,
    )(h_act, scale2, shift2, w_cat, x, scale1, shift1)


# ---------------- residual block ----------------

def init_residual_params(key, in_c, out_c, stride=1):
    k1, k2, k3 = jax.random.split(key, 3)
    params = {
        # PyTorch BatchNorm2d default init: weight=1, bias=0
        "bn1_gamma": jnp.ones((in_c,), jnp.float32),
        "bn1_beta": jnp.zeros((in_c,), jnp.float32),
        "w1": 0.1 * jax.random.normal(k1, (out_c, in_c, 3, 3), jnp.float32),
        "bn2_gamma": jnp.ones((out_c,), jnp.float32),
        "bn2_beta": jnp.zeros((out_c,), jnp.float32),
        "w2": 0.1 * jax.random.normal(k2, (out_c, out_c, 3, 3), jnp.float32),
    }
    if stride >= 2 or in_c != out_c:
        params["w_id"] = 0.1 * jax.random.normal(k3, (out_c, in_c, 1, 1), jnp.float32)
    return params


def residual_forward(params, x_nchw, *, stride, activate_before_residual):
    n, in_c, h, w = x_nchw.shape
    mid_c = params["w1"].shape[0]
    out_c = params["w2"].shape[0]
    ho = (h - 1) // stride + 1
    wo = (w - 1) // stride + 1

    x = jnp.transpose(x_nchw, (0, 2, 3, 1)).astype(jnp.bfloat16)   # NHWC, bf16

    # BN1 training-mode batch stats: Pallas per-image partial sums + O(C) finalize.
    s1p, q1p = bn_partials(x)
    scale1, shift1 = finalize_bn(s1p, q1p, params["bn1_gamma"], params["bn1_beta"],
                                 n * h * w)

    # conv1: BN1-apply + LeakyReLU + in-kernel pad + 3x3 (stride s); also emits
    # per-image BN2 partial sums so h is never re-read for statistics.
    w1_mat = jnp.transpose(params["w1"], (2, 3, 1, 0)).reshape(9 * in_c, mid_c)
    h_act, s2p, q2p = conv1_bn_lrelu(x, scale1, shift1, w1_mat.astype(jnp.bfloat16),
                                     stride=stride, ho=ho, wo=wo)
    scale2, shift2 = finalize_bn(s2p, q2p, params["bn2_gamma"], params["bn2_beta"],
                                 n * ho * wo)

    w2_mat = jnp.transpose(params["w2"], (2, 3, 1, 0)).reshape(9 * mid_c, out_c)
    has_wid = "w_id" in params
    if has_wid:
        w_id = params["w_id"].reshape(out_c, in_c).T               # (in_c, out_c)
        w_cat = jnp.concatenate([w2_mat, w_id], axis=0)            # [w2 ; w_id] along K
    else:
        w_cat = w2_mat

    out = conv2_bn_lrelu_residual(
        h_act, scale2, shift2, w_cat.astype(jnp.bfloat16), x, scale1, shift1,
        stride=stride, has_wid=has_wid, ident_preact=activate_before_residual,
        out_c=out_c)
    return jnp.transpose(out, (0, 3, 1, 2))                        # back to NCHW

# TODO(synk): running_mean/running_var momentum updates (a training-only side effect)
# are not materialized; they do not affect the forward output in training mode.


if __name__ == "__main__":
    key = jax.random.PRNGKey(0)
    kx, kp1, kp2 = jax.random.split(key, 3)

    x = jax.random.normal(kx, (2, 4, 16, 16), jnp.float32)  # NCHW

    # config 1: channel expansion + stride-2 downsample (fused 1x1 identity conv)
    params1 = init_residual_params(kp1, in_c=4, out_c=8, stride=2)
    y1 = residual_forward(params1, x, stride=2, activate_before_residual=False)
    y1 = jax.block_until_ready(y1)
    assert y1.shape == (2, 8, 8, 8), y1.shape

    # config 2: same channels, stride 1, activate_before_residual=True (passthrough)
    params2 = init_residual_params(kp2, in_c=4, out_c=4, stride=1)
    y2 = residual_forward(params2, x, stride=1, activate_before_residual=True)
    y2 = jax.block_until_ready(y2)
    assert y2.shape == (2, 4, 16, 16), y2.shape

    assert bool(jnp.all(jnp.isfinite(y1))) and bool(jnp.all(jnp.isfinite(y2)))
    print("KERNEL_OK")
</pallas_src>

<mosaic_0001>
module attributes {stable_mosaic.version = 11 : i64} {
  func.func @_bn_partials_kernel(%arg0: i32, %arg1: memref<1x16x16x4xbf16, #tpu.memory_space<vmem>>, %arg2: memref<1x1x4xf32, #tpu.memory_space<vmem>>, %arg3: memref<1x1x4xf32, #tpu.memory_space<vmem>>) attributes {dimension_semantics = [#tpu.dimension_semantics<parallel>], iteration_bounds = array<i64: 2>, scalar_prefetch = 0 : i64, scratch_operands = 0 : i64, tpu.core_type = #tpu.core_type<tc>, window_params = [{transform_indices = @transform_0, window_bounds = array<i64: 1, 16, 16, 4>}, {transform_indices = @transform_1, window_bounds = array<i64: 1, 1, 4>}, {transform_indices = @transform_2, window_bounds = array<i64: 1, 1, 4>}]} {
    %c0 = arith.constant 0 : index
    %c0_0 = arith.constant 0 : index
    %c0_1 = arith.constant 0 : index
    %c0_2 = arith.constant 0 : index
    %0 = vector.load %arg1[%c0, %c0_0, %c0_1, %c0_2] : memref<1x16x16x4xbf16, #tpu.memory_space<vmem>>, vector<1x16x16x4xbf16>
    %1 = vector.shape_cast %0 : vector<1x16x16x4xbf16> to vector<16x16x4xbf16>
    %2 = arith.extf %1 : vector<16x16x4xbf16> to vector<16x16x4xf32>
    %3 = vector.shape_cast %2 : vector<16x16x4xf32> to vector<256x4xf32>
    %cst = arith.constant dense<0.000000e+00> : vector<4xf32>
    %4 = vector.multi_reduction <add>, %3, %cst [0] : vector<256x4xf32> to vector<4xf32>
    %5 = vector.shape_cast %4 : vector<4xf32> to vector<1x4xf32>
    %c0_3 = arith.constant 0 : index
    %c0_4 = arith.constant 0 : index
    %c0_5 = arith.constant 0 : index
    %6 = vector.load %arg2[%c0_3, %c0_4, %c0_5] : memref<1x1x4xf32, #tpu.memory_space<vmem>>, vector<1x1x4xf32>
    %7 = vector.shape_cast %6 : vector<1x1x4xf32> to vector<1x4xf32>
    %8 = vector.shape_cast %5 : vector<1x4xf32> to vector<1x1x4xf32>
    tpu.vector_store %arg2[%c0_3, %c0_4, %c0_5], %8 {strides = array<i32>} : memref<1x1x4xf32, #tpu.memory_space<vmem>>, vector<1x1x4xf32>,
    %9 = arith.mulf %3, %3 : vector<256x4xf32>
    %cst_6 = arith.constant dense<0.000000e+00> : vector<4xf32>
    %10 = vector.multi_reduction <add>, %9, %cst_6 [0] : vector<256x4xf32> to vector<4xf32>
    %11 = vector.shape_cast %10 : vector<4xf32> to vector<1x4xf32>
    %c0_7 = arith.constant 0 : index
    %c0_8 = arith.constant 0 : index
    %c0_9 = arith.constant 0 : index
    %12 = vector.load %arg3[%c0_7, %c0_8, %c0_9] : memref<1x1x4xf32, #tpu.memory_space<vmem>>, vector<1x1x4xf32>
    %13 = vector.shape_cast %12 : vector<1x1x4xf32> to vector<1x4xf32>
    %14 = vector.shape_cast %11 : vector<1x4xf32> to vector<1x1x4xf32>
    tpu.vector_store %arg3[%c0_7, %c0_8, %c0_9], %14 {strides = array<i32>} : memref<1x1x4xf32, #tpu.memory_space<vmem>>, vector<1x1x4xf32>,
    return
  }
  func.func @transform_0(%arg0: i32) -> (i32, i32, i32, i32) {
    %c0_i32 = arith.constant 0 : i32
    %c0_i32_0 = arith.constant 0 : i32
    %c0_i32_1 = arith.constant 0 : i32
    %c0_i32_2 = arith.constant 0 : i32
    return %arg0, %c0_i32, %c0_i32_0, %c0_i32_1 : i32, i32, i32, i32
  }
  func.func @transform_1(%arg0: i32) -> (i32, i32, i32) {
    %c0_i32 = arith.constant 0 : i32
    %c0_i32_0 = arith.constant 0 : i32
    %c0_i32_1 = arith.constant 0 : i32
    return %arg0, %c0_i32, %c0_i32_0 : i32, i32, i32
  }
  func.func @transform_2(%arg0: i32) -> (i32, i32, i32) {
    %c0_i32 = arith.constant 0 : i32
    %c0_i32_0 = arith.constant 0 : i32
    %c0_i32_1 = arith.constant 0 : i32
    return %arg0, %c0_i32, %c0_i32_0 : i32, i32, i32
  }
}

</mosaic_0001>

<llo_original>
// kernel: tpu_custom_call.1
$region0: #{tpu_custom_call.1}
  #allocation0 [shape = 'u32[]', space=smem, size = 0x4, offset = 0x4, fixed_abs, tag = 'smem constant byte address 0x4 - core index']
  #allocation1 [shape = 'u32[144,128]{1,0:T(1,128)}', space=vmem, size = 0x12000, scoped, tag = 'internal scratch']
  %s0 = inlined_call_operand.vmem [shape: bf16[2,16,16,4], index: 0, kind: input, shape index: {}]
  %s1 = inlined_call_operand.hbm [shape: f32[2,1,4], index: 1, kind: output, shape index: {0}]
  %s2 = inlined_call_operand.hbm [shape: f32[2,1,4], index: 2, kind: output, shape index: {1}]
  %3 = xla_tuple %s1, %s2
  %s4 = sld [smem:[#allocation0]]
  $region45: #{tpu_custom_call.1} parent=0
    _
  %s6 = ssub.s32 1, %s4
  %s7 = scalar_select 0, %s6, %s4
  $region1: #{tpu_custom_call.1} parent=0
    #allocation2 [shape = 'u8[1024]{0}', space=vmem, size = 0x400, scoped, tag = 'output window, operand 0']
    #allocation3 [shape = 's32[2]{0}', space=sflag, size = 0x8, scoped, tag = 'scoped memory for tpu_custom_call.1']
    #allocation4 [shape = 'u8[1024]{0}', space=vmem, size = 0x400, scoped, tag = 'output window, operand 1']
    #allocation5 [shape = 's32[2]{0}', space=sflag, size = 0x8, scoped, tag = 'scoped memory for tpu_custom_call.1']
    %8 = vsyncpa [#allocation3], 0
    %s9 = scalar_lea.sflag [#allocation3], 1
    %10 = vsyncpa %s9, 0
    %11 = vsyncpa [#allocation5], 0
    %s12 = scalar_lea.sflag [#allocation5], 1
    %13 = vsyncpa %s12, 0
    loop: start=0, step=1, limit=4
    $region2: #{tpu_custom_call.1} parent=1 // loop_pre_header
      _
    $region3: #{tpu_custom_call.1} parent=1 // loop_header
      %s15 = sphi 0, %s19
      %p16 = scmp.ge.s32.totalorder %s15, 4
      %s25 = sphi 0, %s27
      %s28 = sphi 0, %s25
      %s29 = sphi 0, %s28
      %s45 = sphi 0, %s29
      %s51 = sphi 0, %s53
      %s54 = sphi 0, %s51
      %s55 = sphi 0, %s54
      %s71 = sphi 0, %s55
      %s77 = sphi 0, %s79
      %s80 = sphi 0, %s77
      %s81 = sphi 0, %s80
      %s97 = sphi 0, %s81
    $region4: #{tpu_custom_call.1} parent=1 // loop_header_branch
      %18 = sbr.rel (%p16) target = $region8
    $region5: #{tpu_custom_call.1} parent=1 // loop_body
      %s20 = ssub.s32 %s15, 1
      %s21 = ssub.s32 %s15, 2
      %s22 = sadd.s32 %s15, 1
      %s23 = ssub.s32 %s15, %s22
      %p24 = scmp.eq.s32.totalorder %s23, 0
      %s26 = sadd.s32 %s25, 1
      %s27 = scalar_select %p24, %s25, %s26
      %p30 = pneg %p24
      %p31 = scmp.eq.s32.totalorder %s15, 1
      %p32 = por %p30, %p31
      %p33 = scmp.ne.s32.totalorder %s25, %s28
      %p34 = scmp.eq.s32.totalorder %s15, 0
      %p35 = por %p33, %p34
      %p36 = scmp.ne.s32.totalorder %s25, %s28
      %p37 = scmp.eq.s32.totalorder %s20, 1
      %p38 = por %p36, %p37
      %p39 = scmp.ne.s32.totalorder %s28, %s29
      %p40 = scmp.eq.s32.totalorder %s20, 0
      %p41 = por %p39, %p40
      %p42 = scmp.ne.s32.totalorder %s28, %s29
      %p43 = scmp.eq.s32.totalorder %s21, 1
      %p44 = por %p42, %p43
      %p46 = scmp.ne.s32.totalorder %s29, %s45
      %p47 = scmp.eq.s32.totalorder %s21, 0
      %p48 = por %p46, %p47
      %s49 = ssub.s32 %s15, %s22
      %p50 = scmp.eq.s32.totalorder %s49, 0
      %s52 = sadd.s32 %s51, 1
      %s53 = scalar_select %p50, %s51, %s52
      %p56 = pneg %p50
      %p57 = scmp.eq.s32.totalorder %s15, 1
      %p58 = por %p56, %p57
      %p59 = scmp.ne.s32.totalorder %s51, %s54
      %p60 = scmp.eq.s32.totalorder %s15, 0
      %p61 = por %p59, %p60
      %p62 = scmp.ne.s32.totalorder %s51, %s54
      %p63 = scmp.eq.s32.totalorder %s20, 1
      %p64 = por %p62, %p63
      %p65 = scmp.ne.s32.totalorder %s54, %s55
      %p66 = scmp.eq.s32.totalorder %s20, 0
      %p67 = por %p65, %p66
      %p68 = scmp.ne.s32.totalorder %s54, %s55
      %p69 = scmp.eq.s32.totalorder %s21, 1
      %p70 = por %p68, %p69
      %p72 = scmp.ne.s32.totalorder %s55, %s71
      %p73 = scmp.eq.s32.totalorder %s21, 0
      %p74 = por %p72, %p73
      %s75 = ssub.s32 %s15, %s22
      %p76 = scmp.eq.s32.totalorder %s75, 0
      %s78 = sadd.s32 %s77, 1
      %s79 = scalar_select %p76, %s77, %s78
      %p82 = pneg %p76
      %p83 = scmp.eq.s32.totalorder %s15, 1
      %p84 = por %p82, %p83
      %p85 = scmp.ne.s32.totalorder %s77, %s80
      %p86 = scmp.eq.s32.totalorder %s15, 0
      %p87 = por %p85, %p86
      %p88 = scmp.ne.s32.totalorder %s77, %s80
      %p89 = scmp.eq.s32.totalorder %s20, 1
      %p90 = por %p88, %p89
      %p91 = scmp.ne.s32.totalorder %s80, %s81
      %p92 = scmp.eq.s32.totalorder %s20, 0
      %p93 = por %p91, %p92
      %p94 = scmp.ne.s32.totalorder %s80, %s81
      %p95 = scmp.eq.s32.totalorder %s21, 1
      %p96 = por %p94, %p95
      %p98 = scmp.ne.s32.totalorder %s81, %s97
      %p99 = scmp.eq.s32.totalorder %s21, 0
      %p100 = por %p98, %p99
      %p101 = scmp.le.s32.totalorder 1, %s15
      %p102 = scmp.lt.s32.totalorder %s15, 3
      %p103 = pnand %p101, %p102
      %p104 = pneg %p103
      // Predicated region
      $region9: #{tpu_custom_call.1} parent=5 // pred_check
        _
      $region10: #{tpu_custom_call.1} parent=5 // pred_check_branch
        %106 = sbr.rel (%p103) target = $region12
      $region11: #{tpu_custom_call.1} parent=5 // pred_region
        %s107 = ssub.s32 %s15, 1
      $region12: #{tpu_custom_call.1} parent=5 // pred_fallthru
        _
      %p108 = scmp.lt.s32.totalorder %s15, 2
      // Predicated region
      $region13: #{tpu_custom_call.1} parent=5 // pred_check
        %p109 = pneg %p108
      $region14: #{tpu_custom_call.1} parent=5 // pred_check_branch
        %111 = sbr.rel (%p109) target = $region16
      $region15: #{tpu_custom_call.1} parent=5 // pred_region
        // Predicated region
        $region17: #{tpu_custom_call.1} parent=15 // pred_check
          %p112 = pneg %p35
        $region18: #{tpu_custom_call.1} parent=15 // pred_check_branch
          %114 = sbr.rel (%p112) target = $region20
        $region19: #{tpu_custom_call.1} parent=15 // pred_region
          %p115 = scmp.lt.s32.totalorder %s15, 1
          %s116 = scalar_select %p115, %s15, 1
          %s117 = smul.addr %s116, 32
          %s118 = smul.addr %s117, 4
          %s119 = scalar_lea.vmem %s0, %s118
        $region20: #{tpu_custom_call.1} parent=15 // pred_fallthru
          _
      $region16: #{tpu_custom_call.1} parent=5 // pred_fallthru
        _
      %p120 = scmp.le.s32.totalorder 1, %s15
      %p121 = scmp.lt.s32.totalorder %s15, 3
      %p122 = pnand %p120, %p121
      %p123 = pneg %p122
      // Predicated region
      $region21: #{tpu_custom_call.1} parent=5 // pred_check
        _
      $region22: #{tpu_custom_call.1} parent=5 // pred_check_branch
        %125 = sbr.rel (%p122) target = $region24
      $region23: #{tpu_custom_call.1} parent=5 // pred_region
        %s126 = ssub.s32 %s15, 1
        %p127 = scmp.lt.s32.totalorder %s20, 1
        %s128 = scalar_select %p127, %s20, 1
        %s129 = smul.addr %s128, 32
        %s130 = smul.addr %s129, 4
        %s131 = scalar_lea.vmem %s0, %s130
        %p132 = pneg %p41
        %p133 = pneg %p38
        %p134 = pneg %p67
        %p135 = pneg %p64
        %s136 = sand.u32 %s54, 1
        %s137 = scalar_lea.sflag [#allocation3], %s136
        %s138 = sand.u32 %s54, 1
        %s139 = scalar_lea.vmem [#allocation2], %s138
        %p140 = pneg %p93
        %p141 = pneg %p90
        %s142 = sand.u32 %s80, 1
        %s143 = scalar_lea.sflag [#allocation5], %s142
        %s144 = sand.u32 %s80, 1
        %s145 = scalar_lea.vmem [#allocation4], %s144
        %p146 = scmp.lt.s32.totalorder %s20, 1
        %s147 = scalar_select %p146, %s20, 1
        %s148 = smul.addr %s147, 32
        %s149 = smul.addr %s148, 4
        %s150 = scalar_lea.vmem %s0, %s149
        %v151 = vld [vmem:[%s150] sm:$0xf]
        %v152 = vld [vmem:[%s150 + $0x4] sm:$0xf]
        %v153 = vld [vmem:[%s150 + $0x8] sm:$0xf]
        %v154 = vld [vmem:[%s150 + $0xc] sm:$0xf]
        %v155 = vld [vmem:[%s150 + $0x10] sm:$0xf]
        %v156 = vld [vmem:[%s150 + $0x14] sm:$0xf]
        %v157 = vld [vmem:[%s150 + $0x18] sm:$0xf]
        %v158 = vld [vmem:[%s150 + $0x1c] sm:$0xf]
        %v159 = vld [vmem:[%s150 + $0x20] sm:$0xf]
        %v160 = vld [vmem:[%s150 + $0x24] sm:$0xf]
        %v161 = vld [vmem:[%s150 + $0x28] sm:$0xf]
        %v162 = vld [vmem:[%s150 + $0x2c] sm:$0xf]
        %v163 = vld [vmem:[%s150 + $0x30] sm:$0xf]
        %v164 = vld [vmem:[%s150 + $0x34] sm:$0xf]
        %v165 = vld [vmem:[%s150 + $0x38] sm:$0xf]
        %v166 = vld [vmem:[%s150 + $0x3c] sm:$0xf]
        %v167 = vld [vmem:[%s150 + $0x40] sm:$0xf]
        %v168 = vld [vmem:[%s150 + $0x44] sm:$0xf]
        %v169 = vld [vmem:[%s150 + $0x48] sm:$0xf]
        %v170 = vld [vmem:[%s150 + $0x4c] sm:$0xf]
        %v171 = vld [vmem:[%s150 + $0x50] sm:$0xf]
        %v172 = vld [vmem:[%s150 + $0x54] sm:$0xf]
        %v173 = vld [vmem:[%s150 + $0x58] sm:$0xf]
        %v174 = vld [vmem:[%s150 + $0x5c] sm:$0xf]
        %v175 = vld [vmem:[%s150 + $0x60] sm:$0xf]
        %v176 = vld [vmem:[%s150 + $0x64] sm:$0xf]
        %v177 = vld [vmem:[%s150 + $0x68] sm:$0xf]
        %v178 = vld [vmem:[%s150 + $0x6c] sm:$0xf]
        %v179 = vld [vmem:[%s150 + $0x70] sm:$0xf]
        %v180 = vld [vmem:[%s150 + $0x74] sm:$0xf]
        %v181 = vld [vmem:[%s150 + $0x78] sm:$0xf]
        %v182 = vld [vmem:[%s150 + $0x7c] sm:$0xf]
        %v183 = vunpack.c.l.bf16 %v151
        %v184 = vunpack.c.l.bf16 %v152
        %v185 = vunpack.c.l.bf16 %v153
        %v186 = vunpack.c.l.bf16 %v154
        %v187 = vunpack.c.l.bf16 %v155
        %v188 = vunpack.c.l.bf16 %v156
        %v189 = vunpack.c.l.bf16 %v157
        %v190 = vunpack.c.l.bf16 %v158
        %v191 = vunpack.c.l.bf16 %v159
        %v192 = vunpack.c.l.bf16 %v160
        %v193 = vunpack.c.l.bf16 %v161
        %v194 = vunpack.c.l.bf16 %v162
        %v195 = vunpack.c.l.bf16 %v163
        %v196 = vunpack.c.l.bf16 %v164
        %v197 = vunpack.c.l.bf16 %v165
        %v198 = vunpack.c.l.bf16 %v166
        %v199 = vunpack.c.l.bf16 %v167
        %v200 = vunpack.c.l.bf16 %v168
        %v201 = vunpack.c.l.bf16 %v169
        %v202 = vunpack.c.l.bf16 %v170
        %v203 = vunpack.c.l.bf16 %v171
        %v204 = vunpack.c.l.bf16 %v172
        %v205 = vunpack.c.l.bf16 %v173
        %v206 = vunpack.c.l.bf16 %v174
        %v207 = vunpack.c.l.bf16 %v175
        %v208 = vunpack.c.l.bf16 %v176
        %v209 = vunpack.c.l.bf16 %v177
        %v210 = vunpack.c.l.bf16 %v178
        %v211 = vunpack.c.l.bf16 %v179
        %v212 = vunpack.c.l.bf16 %v180
        %v213 = vunpack.c.l.bf16 %v181
        %v214 = vunpack.c.l.bf16 %v182
        %vm215 = vcmask 31744
        %v216 = vsel %vm215, %v183, 0.0
        %v217 = vsel %vm215, %v184, 0.0
        %v218 = vadd.f32 %v216, %v217
        %v219 = vsel %vm215, %v185, 0.0
        %v220 = vadd.f32 %v218, %v219
        %v221 = vsel %vm215, %v186, 0.0
        %v222 = vadd.f32 %v220, %v221
        %v223 = vsel %vm215, %v187, 0.0
        %v224 = vadd.f32 %v222, %v223
        %v225 = vsel %vm215, %v188, 0.0
        %v226 = vadd.f32 %v224, %v225
        %v227 = vsel %vm215, %v189, 0.0
        %v228 = vadd.f32 %v226, %v227
        %v229 = vsel %vm215, %v190, 0.0
        %v230 = vadd.f32 %v228, %v229
        %v231 = vsel %vm215, %v191, 0.0
        %v232 = vadd.f32 %v230, %v231
        %v233 = vsel %vm215, %v192, 0.0
        %v234 = vadd.f32 %v232, %v233
        %v235 = vsel %vm215, %v193, 0.0
        %v236 = vadd.f32 %v234, %v235
        %v237 = vsel %vm215, %v194, 0.0
        %v238 = vadd.f32 %v236, %v237
        %v239 = vsel %vm215, %v195, 0.0
        %v240 = vadd.f32 %v238, %v239
        %v241 = vsel %vm215, %v196, 0.0
        %v242 = vadd.f32 %v240, %v241
        %v243 = vsel %vm215, %v197, 0.0
        %v244 = vadd.f32 %v242, %v243
        %v245 = vsel %vm215, %v198, 0.0
        %v246 = vadd.f32 %v244, %v245
        %v247 = vsel %vm215, %v199, 0.0
        %v248 = vadd.f32 %v246, %v247
        %v249 = vsel %vm215, %v200, 0.0
        %v250 = vadd.f32 %v248, %v249
        %v251 = vsel %vm215, %v201, 0.0
        %v252 = vadd.f32 %v250, %v251
        %v253 = vsel %vm215, %v202, 0.0
        %v254 = vadd.f32 %v252, %v253
        %v255 = vsel %vm215, %v203, 0.0
        %v256 = vadd.f32 %v254, %v255
        %v257 = vsel %vm215, %v204, 0.0
        %v258 = vadd.f32 %v256, %v257
        %v259 = vsel %vm215, %v205, 0.0
        %v260 = vadd.f32 %v258, %v259
        %v261 = vsel %vm215, %v206, 0.0
        %v262 = vadd.f32 %v260, %v261
        %v263 = vsel %vm215, %v207, 0.0
        %v264 = vadd.f32 %v262, %v263
        %v265 = vsel %vm215, %v208, 0.0
        %v266 = vadd.f32 %v264, %v265
        %v267 = vsel %vm215, %v209, 0.0
        %v268 = vadd.f32 %v266, %v267
        %v269 = vsel %vm215, %v210, 0.0
        %v270 = vadd.f32 %v268, %v269
        %v271 = vsel %vm215, %v211, 0.0
        %v272 = vadd.f32 %v270, %v271
        %v273 = vsel %vm215, %v212, 0.0
        %v274 = vadd.f32 %v272, %v273
        %v275 = vsel %vm215, %v213, 0.0
        %v276 = vadd.f32 %v274, %v275
        %v277 = vsel %vm215, %v214, 0.0
        %v278 = vadd.f32 %v276, %v277
        %v279 = vrot.slane %v278, 4
        %v280 = vadd.f32 %v278, %v279
        %v281 = vrot.slane %v280, 2
        %v282 = vadd.f32 %v280, %v281
        %v283 = vrot.slane %v282, 1
        %v284 = vadd.f32 %v282, %v283
        %vm285 = vcmask 24576
        %286 = vst.msk [vmem:[%s139] sm:$0x1] %vm285, %v284
        %v287 = vmul.f32 %v183, %v183
        %v288 = vmul.f32 %v184, %v184
        %v289 = vmul.f32 %v185, %v185
        %v290 = vmul.f32 %v186, %v186
        %v291 = vmul.f32 %v187, %v187
        %v292 = vmul.f32 %v188, %v188
        %v293 = vmul.f32 %v189, %v189
        %v294 = vmul.f32 %v190, %v190
        %v295 = vmul.f32 %v191, %v191
        %v296 = vmul.f32 %v192, %v192
        %v297 = vmul.f32 %v193, %v193
        %v298 = vmul.f32 %v194, %v194
        %v299 = vmul.f32 %v195, %v195
        %v300 = vmul.f32 %v196, %v196
        %v301 = vmul.f32 %v197, %v197
        %v302 = vmul.f32 %v198, %v198
        %v303 = vmul.f32 %v199, %v199
        %v304 = vmul.f32 %v200, %v200
        %v305 = vmul.f32 %v201, %v201
        %v306 = vmul.f32 %v202, %v202
        %v307 = vmul.f32 %v203, %v203
        %v308 = vmul.f32 %v204, %v204
        %v309 = vmul.f32 %v205, %v205
        %v310 = vmul.f32 %v206, %v206
        %v311 = vmul.f32 %v207, %v207
        %v312 = vmul.f32 %v208, %v208
        %v313 = vmul.f32 %v209, %v209
        %v314 = vmul.f32 %v210, %v210
        %v315 = vmul.f32 %v211, %v211
        %v316 = vmul.f32 %v212, %v212
        %v317 = vmul.f32 %v213, %v213
        %v318 = vmul.f32 %v214, %v214
        %v319 = vsel %vm215, %v287, 0.0
        %v320 = vsel %vm215, %v288, 0.0
        %v321 = vadd.f32 %v319, %v320
        %v322 = vsel %vm215, %v289, 0.0
        %v323 = vadd.f32 %v321, %v322
        %v324 = vsel %vm215, %v290, 0.0
        %v325 = vadd.f32 %v323, %v324
        %v326 = vsel %vm215, %v291, 0.0
        %v327 = vadd.f32 %v325, %v326
        %v328 = vsel %vm215, %v292, 0.0
        %v329 = vadd.f32 %v327, %v328
        %v330 = vsel %vm215, %v293, 0.0
        %v331 = vadd.f32 %v329, %v330
        %v332 = vsel %vm215, %v294, 0.0
        %v333 = vadd.f32 %v331, %v332
        %v334 = vsel %vm215, %v295, 0.0
        %v335 = vadd.f32 %v333, %v334
        %v336 = vsel %vm215, %v296, 0.0
        %v337 = vadd.f32 %v335, %v336
        %v338 = vsel %vm215, %v297, 0.0
        %v339 = vadd.f32 %v337, %v338
        %v340 = vsel %vm215, %v298, 0.0
        %v341 = vadd.f32 %v339, %v340
        %v342 = vsel %vm215, %v299, 0.0
        %v343 = vadd.f32 %v341, %v342
        %v344 = vsel %vm215, %v300, 0.0
        %v345 = vadd.f32 %v343, %v344
        %v346 = vsel %vm215, %v301, 0.0
        %v347 = vadd.f32 %v345, %v346
        %v348 = vsel %vm215, %v302, 0.0
        %v349 = vadd.f32 %v347, %v348
        %v350 = vsel %vm215, %v303, 0.0
        %v351 = vadd.f32 %v349, %v350
        %v352 = vsel %vm215, %v304, 0.0
        %v353 = vadd.f32 %v351, %v352
        %v354 = vsel %vm215, %v305, 0.0
        %v355 = vadd.f32 %v353, %v354
        %v356 = vsel %vm215, %v306, 0.0
        %v357 = vadd.f32 %v355, %v356
        %v358 = vsel %vm215, %v307, 0.0
        %v359 = vadd.f32 %v357, %v358
        %v360 = vsel %vm215, %v308, 0.0
        %v361 = vadd.f32 %v359, %v360
        %v362 = vsel %vm215, %v309, 0.0
        %v363 = vadd.f32 %v361, %v362
        %v364 = vsel %vm215, %v310, 0.0
        %v365 = vadd.f32 %v363, %v364
        %v366 = vsel %vm215, %v311, 0.0
        %v367 = vadd.f32 %v365, %v366
        %v368 = vsel %vm215, %v312, 0.0
        %v369 = vadd.f32 %v367, %v368
        %v370 = vsel %vm215, %v313, 0.0
        %v371 = vadd.f32 %v369, %v370
        %v372 = vsel %vm215, %v314, 0.0
        %v373 = vadd.f32 %v371, %v372
        %v374 = vsel %vm215, %v315, 0.0
        %v375 = vadd.f32 %v373, %v374
        %v376 = vsel %vm215, %v316, 0.0
        %v377 = vadd.f32 %v375, %v376
        %v378 = vsel %vm215, %v317, 0.0
        %v379 = vadd.f32 %v377, %v378
        %v380 = vsel %vm215, %v318, 0.0
        %v381 = vadd.f32 %v379, %v380
        %v382 = vrot.slane %v381, 4
        %v383 = vadd.f32 %v381, %v382
        %v384 = vrot.slane %v383, 2
        %v385 = vadd.f32 %v383, %v384
        %v386 = vrot.slane %v385, 1
        %v387 = vadd.f32 %v385, %v386
        %388 = vst.msk [vmem:[%s145] sm:$0x1] %vm285, %v387
        %s389 = sand.u32 %s54, 1
        %s390 = scalar_lea.sflag [#allocation3], %s389
        %s391 = sand.u32 %s54, 1
        %s392 = scalar_lea.vmem [#allocation2], %s391
        %s393 = sand.u32 %s80, 1
        %s394 = scalar_lea.sflag [#allocation5], %s393
        %s395 = sand.u32 %s80, 1
        %s396 = scalar_lea.vmem [#allocation4], %s395
        // Predicated region
        $region25: #{tpu_custom_call.1} parent=23 // pred_check
          %p397 = pneg %p64
        $region26: #{tpu_custom_call.1} parent=23 // pred_check_branch
          %399 = sbr.rel (%p397) target = $region28
        $region27: #{tpu_custom_call.1} parent=23 // pred_region
          %s401 = ssub.s32 16, 16
          %402 = vsyncadd %s390, %s401
          %s403 = smul.addr %s20, 16
          %s404 = scalar_lea.hbm %s1, %s403
          %s406 = sshll.u32 %s392, 4
          %s407 = int_to_ptr.vmem [resolvable:$true] %s406
          %409 = dma.vmem_to_hbm [thread:$0]  %s407, 16, %s404, %s390
        $region28: #{tpu_custom_call.1} parent=23 // pred_fallthru
          _
        // Predicated region
        $region29: #{tpu_custom_call.1} parent=23 // pred_check
          %p410 = pneg %p90
        $region30: #{tpu_custom_call.1} parent=23 // pred_check_branch
          %412 = sbr.rel (%p410) target = $region32
        $region31: #{tpu_custom_call.1} parent=23 // pred_region
          %s414 = ssub.s32 16, 16
          %415 = vsyncadd %s394, %s414
          %s416 = smul.addr %s20, 16
          %s417 = scalar_lea.hbm %s2, %s416
          %s419 = sshll.u32 %s396, 4
          %s420 = int_to_ptr.vmem [resolvable:$true] %s419
          %422 = dma.vmem_to_hbm [thread:$0]  %s420, 16, %s417, %s394
        $region32: #{tpu_custom_call.1} parent=23 // pred_fallthru
          _
      $region24: #{tpu_custom_call.1} parent=5 // pred_fallthru
        _
      %p423 = scmp.le.s32.totalorder 2, %s15
      // Predicated region
      $region33: #{tpu_custom_call.1} parent=5 // pred_check
        %p424 = pneg %p423
      $region34: #{tpu_custom_call.1} parent=5 // pred_check_branch
        %426 = sbr.rel (%p424) target = $region36
      $region35: #{tpu_custom_call.1} parent=5 // pred_region
        %s427 = ssub.s32 %s15, 2
        // Predicated region
        $region37: #{tpu_custom_call.1} parent=35 // pred_check
          %p428 = pneg %p70
        $region38: #{tpu_custom_call.1} parent=35 // pred_check_branch
          %430 = sbr.rel (%p428) target = $region40
        $region39: #{tpu_custom_call.1} parent=35 // pred_region
          %s431 = sand.u32 %s55, 1
          %s432 = scalar_lea.sflag [#allocation3], %s431
          %s433 = sand.u32 %s55, 1
          %s434 = scalar_lea.vmem [#allocation2], %s433
          %435 = dma.done %s432, 16
        $region40: #{tpu_custom_call.1} parent=35 // pred_fallthru
          _
        // Predicated region
        $region41: #{tpu_custom_call.1} parent=35 // pred_check
          %p436 = pneg %p96
        $region42: #{tpu_custom_call.1} parent=35 // pred_check_branch
          %438 = sbr.rel (%p436) target = $region44
        $region43: #{tpu_custom_call.1} parent=35 // pred_region
          %s439 = sand.u32 %s81, 1
          %s440 = scalar_lea.sflag [#allocation5], %s439
          %s441 = sand.u32 %s81, 1
          %s442 = scalar_lea.vmem [#allocation4], %s441
          %443 = dma.done %s440, 16
        $region44: #{tpu_custom_call.1} parent=35 // pred_fallthru
          _
      $region36: #{tpu_custom_call.1} parent=5 // pred_fallthru
        _
    $region6: #{tpu_custom_call.1} parent=1 // loop_footer
      %s19 = sadd.s32 1, %s15
    $region7: #{tpu_custom_call.1} parent=1 // loop_footer_branch
      %14 = sbr.rel target = $region3
    $region8: #{tpu_custom_call.1} parent=1 // loop_exit
      _
    %444 = vsyncpa [#allocation3], 1
    %s445 = scalar_lea.sflag [#allocation3], 1
    %446 = vsyncpa %s445, 1
    %447 = vsyncpa [#allocation5], 1
    %s448 = scalar_lea.sflag [#allocation5], 1
    %449 = vsyncpa %s448, 1

</llo_original>
